<compile_context>
chip_gen: v7x
topology: tpu7x:2x2x1
jax: 0.10.0
libtpu: 0.0.40
codegen_flags: <defaults>
</compile_context>

<pallas_src>
import math
import jax
import jax.numpy as jnp
from jax.experimental import pallas as pl
from jax.experimental.pallas import tpu as pltpu


def lstm_cell_kernel(xh_ref, c_ref, w_ref, b_ref, out_ref):
    # Fused matmul on the MXU: (tb, In+H) @ (In+H, 4H) -> (tb, 4H), f32 acc.
    gates = (
        jnp.dot(xh_ref[...], w_ref[...], preferred_element_type=jnp.float32)
        + b_ref[...]
    )
    H = c_ref.shape[-1]

    # Gate order along 4H (after wrapper permutation): [i, f, o | g].
    sig = jax.nn.sigmoid(gates[:, : 3 * H])   # one EUP pass for i, f, o
    g_gate = jnp.tanh(gates[:, 3 * H:])       # one EUP pass for the cell gate

    i_gate = sig[:, 0 * H:1 * H]
    f_gate = sig[:, 1 * H:2 * H]
    o_gate = sig[:, 2 * H:3 * H]

    cy = c_ref[...] * f_gate + i_gate * g_gate
    hy = o_gate * jnp.tanh(cy)

    # Stacked lane-dense output [hy | cy]; split in the wrapper.
    out_ref[...] = jnp.concatenate([hy, cy], axis=-1).astype(out_ref.dtype)


def lstm_cell(x, hx, cx, wx, wh, bx, bh):
    """x: (B, In); hx, cx: (B, H); wx: (4H, In); wh: (4H, H); bx, bh: (4H,)."""
    B, In = x.shape
    H = hx.shape[-1]

    # ---- static parameter prep (free per step) ------------------------------
    # Reorder gate rows from PyTorch's [i, f, g, o] to [i, f, o, g].
    order = jnp.array([0, 1, 3, 2])
    wx_r = wx.reshape(4, H, In)[order].reshape(4 * H, In)
    wh_r = wh.reshape(4, H, H)[order].reshape(4 * H, H)
    # Fuse x2h and h2h into one weight, pre-transpose, cast to bf16 for MXU.
    w_cat = jnp.concatenate([wx_r, wh_r], axis=1).T.astype(jnp.bfloat16)  # (In+H, 4H)
    # Pre-sum biases into a single (1, 4H) bias (kept f32).
    b = (bx + bh).reshape(4, H)[order].reshape(1, 4 * H).astype(jnp.float32)

    # ---- per-step glue ------------------------------------------------------
    xh = jnp.concatenate([x, hx], axis=1).astype(jnp.bfloat16)            # (B, In+H)
    cx32 = cx.astype(jnp.float32)

    # Batch tiling: shards across TensorCores on v7x; no-op elsewhere.
    tb = 8 if B % 8 == 0 else B
    grid = (B // tb,)

    flops = 2 * B * (In + H) * 4 * H + 10 * B * H
    transcendentals = 5 * B * H
    bytes_accessed = (
        xh.size * 2 + w_cat.size * 2 + b.size * 4 + cx32.size * 4 + B * 2 * H * 4
    )

    out = pl.pallas_call(
        lstm_cell_kernel,
        out_shape=jax.ShapeDtypeStruct((B, 2 * H), jnp.float32),
        grid=grid,
        in_specs=[
            pl.BlockSpec((tb, In + H), lambda i: (i, 0)),      # [x | h]
            pl.BlockSpec((tb, H), lambda i: (i, 0)),           # cx
            pl.BlockSpec((In + H, 4 * H), lambda i: (0, 0)),   # fused weight (resident)
            pl.BlockSpec((1, 4 * H), lambda i: (0, 0)),        # fused bias (resident)
        ],
        out_specs=pl.BlockSpec((tb, 2 * H), lambda i: (i, 0)),
        compiler_params=pltpu.CompilerParams(
            dimension_semantics=("parallel",),
            vmem_limit_bytes=32 << 20,
        ),
        cost_estimate=pl.CostEstimate(
            flops=flops,
            transcendentals=transcendentals,
            bytes_accessed=bytes_accessed,
        ),
    )(xh, cx32, w_cat, b)

    hy = out[:, :H].astype(x.dtype)
    cy = out[:, H:].astype(x.dtype)
    return hy, cy


def lstm_cell_ref(x, hx, cx, wx, wh, bx, bh):
    """Pure-JAX reference mirroring the PyTorch forward (f32 throughout)."""
    gates = x @ wx.T + bx + hx @ wh.T + bh
    H = hx.shape[-1]
    i, f, g, o = jnp.split(gates, 4, axis=1)
    i = jax.nn.sigmoid(i)
    f = jax.nn.sigmoid(f)
    g = jnp.tanh(g)
    o = jax.nn.sigmoid(o)
    cy = cx * f + i * g
    hy = o * jnp.tanh(cy)
    return hy, cy


if __name__ == "__main__":
    batch = 16
    input_size = 32
    hidden_size = 32

    key = jax.random.PRNGKey(0)
    k_x, k_h, k_c, k_wx, k_wh, k_bx, k_bh = jax.random.split(key, 7)

    # Deterministic parameter init matching reset_parameters: U(-std, std),
    # std = 1/sqrt(hidden_size).
    std = 1.0 / math.sqrt(hidden_size)
    wx = jax.random.uniform(k_wx, (4 * hidden_size, input_size),
                            jnp.float32, -std, std)
    wh = jax.random.uniform(k_wh, (4 * hidden_size, hidden_size),
                            jnp.float32, -std, std)
    bx = jax.random.uniform(k_bx, (4 * hidden_size,), jnp.float32, -std, std)
    bh = jax.random.uniform(k_bh, (4 * hidden_size,), jnp.float32, -std, std)

    x = jax.random.normal(k_x, (batch, input_size), jnp.float32)
    hx = jax.random.normal(k_h, (batch, hidden_size), jnp.float32)
    cx = jax.random.normal(k_c, (batch, hidden_size), jnp.float32)

    hy, cy = jax.jit(lstm_cell)(x, hx, cx, wx, wh, bx, bh)
    jax.block_until_ready((hy, cy))

    hy_ref, cy_ref = lstm_cell_ref(x, hx, cx, wx, wh, bx, bh)
    # bf16 matmul inputs -> loosen tolerance vs. the all-f32 reference.
    assert jnp.allclose(hy, hy_ref, atol=2e-2, rtol=2e-2)
    assert jnp.allclose(cy, cy_ref, atol=2e-2, rtol=2e-2)

    print("KERNEL_OK")
</pallas_src>

<mosaic_0001>
module attributes {stable_mosaic.version = 11 : i64} {
  func.func @lstm_cell_kernel(%arg0: i32, %arg1: memref<8x64xbf16, #tpu.memory_space<vmem>>, %arg2: memref<8x32xf32, #tpu.memory_space<vmem>>, %arg3: memref<64x128xbf16, #tpu.memory_space<vmem>>, %arg4: memref<1x128xf32, #tpu.memory_space<vmem>>, %arg5: memref<8x64xf32, #tpu.memory_space<vmem>>) attributes {dimension_semantics = [#tpu.dimension_semantics<parallel>], iteration_bounds = array<i64: 2>, scalar_prefetch = 0 : i64, scratch_operands = 0 : i64, tpu.core_type = #tpu.core_type<tc>, window_params = [{transform_indices = @transform_0, window_bounds = array<i64: 8, 64>}, {transform_indices = @transform_1, window_bounds = array<i64: 8, 32>}, {pipeline_mode = #tpu.pipeline_mode<synchronous>, transform_indices = @transform_2, window_bounds = array<i64: 64, 128>}, {pipeline_mode = #tpu.pipeline_mode<synchronous>, transform_indices = @transform_3, window_bounds = array<i64: 1, 128>}, {transform_indices = @transform_4, window_bounds = array<i64: 8, 64>}]} {
    %c0 = arith.constant 0 : index
    %c0_0 = arith.constant 0 : index
    %0 = vector.load %arg1[%c0, %c0_0] : memref<8x64xbf16, #tpu.memory_space<vmem>>, vector<8x64xbf16>
    %c0_1 = arith.constant 0 : index
    %c0_2 = arith.constant 0 : index
    %1 = vector.load %arg3[%c0_1, %c0_2] : memref<64x128xbf16, #tpu.memory_space<vmem>>, vector<64x128xbf16>
    %cst = arith.constant dense<0.000000e+00> : vector<8x128xf32>
    %2 = tpu.matmul %0, %1, %cst {dimension_numbers = #tpu.dot_dimension_numbers<[1], [0], [0], [1], [0, 0, 1, 1], [], []>} : vector<8x64xbf16>, vector<64x128xbf16>, vector<8x128xf32> -> vector<8x128xf32>
    %c0_3 = arith.constant 0 : index
    %c0_4 = arith.constant 0 : index
    %3 = vector.load %arg4[%c0_3, %c0_4] : memref<1x128xf32, #tpu.memory_space<vmem>>, vector<1x128xf32>
    %4 = vector.broadcast %3 : vector<1x128xf32> to vector<8x128xf32>
    %5 = arith.addf %2, %4 : vector<8x128xf32>
    %6 = vector.extract_strided_slice %5 {offsets = [0, 0], sizes = [8, 96], strides = [1, 1]} : vector<8x128xf32> to vector<8x96xf32>
    %7 = arith.negf %6 : vector<8x96xf32>
    %8 = math.exp %7 : vector<8x96xf32>
    %cst_5 = arith.constant 1.000000e+00 : f32
    %9 = vector.broadcast %cst_5 : f32 to vector<8x96xf32>
    %10 = arith.addf %9, %8 : vector<8x96xf32>
    %11 = arith.divf %9, %10 : vector<8x96xf32>
    %12 = vector.extract_strided_slice %5 {offsets = [0, 96], sizes = [8, 32], strides = [1, 1]} : vector<8x128xf32> to vector<8x32xf32>
    %13 = math.tanh %12 : vector<8x32xf32>
    %14 = vector.extract_strided_slice %11 {offsets = [0, 0], sizes = [8, 32], strides = [1, 1]} : vector<8x96xf32> to vector<8x32xf32>
    %15 = vector.extract_strided_slice %11 {offsets = [0, 32], sizes = [8, 32], strides = [1, 1]} : vector<8x96xf32> to vector<8x32xf32>
    %16 = vector.extract_strided_slice %11 {offsets = [0, 64], sizes = [8, 32], strides = [1, 1]} : vector<8x96xf32> to vector<8x32xf32>
    %c0_6 = arith.constant 0 : index
    %c0_7 = arith.constant 0 : index
    %17 = vector.load %arg2[%c0_6, %c0_7] : memref<8x32xf32, #tpu.memory_space<vmem>>, vector<8x32xf32>
    %18 = arith.mulf %17, %15 : vector<8x32xf32>
    %19 = arith.mulf %14, %13 : vector<8x32xf32>
    %20 = arith.addf %18, %19 : vector<8x32xf32>
    %21 = math.tanh %20 : vector<8x32xf32>
    %22 = arith.mulf %16, %21 : vector<8x32xf32>
    %23 = tpu.concatenate %22, %20 in 1 : vector<8x32xf32>, vector<8x32xf32> -> vector<8x64xf32>
    %c0_8 = arith.constant 0 : index
    %c0_9 = arith.constant 0 : index
    %24 = vector.load %arg5[%c0_8, %c0_9] : memref<8x64xf32, #tpu.memory_space<vmem>>, vector<8x64xf32>
    tpu.vector_store %arg5[%c0_8, %c0_9], %23 {strides = array<i32>} : memref<8x64xf32, #tpu.memory_space<vmem>>, vector<8x64xf32>,
    return
  }
  func.func @transform_0(%arg0: i32) -> (i32, i32) {
    %c0_i32 = arith.constant 0 : i32
    %c0_i32_0 = arith.constant 0 : i32
    return %arg0, %c0_i32 : i32, i32
  }
  func.func @transform_1(%arg0: i32) -> (i32, i32) {
    %c0_i32 = arith.constant 0 : i32
    %c0_i32_0 = arith.constant 0 : i32
    return %arg0, %c0_i32 : i32, i32
  }
  func.func @transform_2(%arg0: i32) -> (i32, i32) {
    %c0_i32 = arith.constant 0 : i32
    %c0_i32_0 = arith.constant 0 : i32
    %c0_i32_1 = arith.constant 0 : i32
    return %c0_i32, %c0_i32_0 : i32, i32
  }
  func.func @transform_3(%arg0: i32) -> (i32, i32) {
    %c0_i32 = arith.constant 0 : i32
    %c0_i32_0 = arith.constant 0 : i32
    %c0_i32_1 = arith.constant 0 : i32
    return %c0_i32, %c0_i32_0 : i32, i32
  }
  func.func @transform_4(%arg0: i32) -> (i32, i32) {
    %c0_i32 = arith.constant 0 : i32
    %c0_i32_0 = arith.constant 0 : i32
    return %arg0, %c0_i32 : i32, i32
  }
}

</mosaic_0001>

<llo_original>
// kernel: lstm_cell.1
$region0: #{lstm_cell.1}
  #allocation0 [shape = 'u32[]', space=smem, size = 0x4, offset = 0x4, fixed_abs, tag = 'smem constant byte address 0x4 - core index']
  #allocation1 [shape = 'u32[144,128]{1,0:T(1,128)}', space=vmem, size = 0x12000, scoped, tag = 'internal scratch']
  %s0 = inlined_call_operand.vmem [shape: bf16[16,64], index: 0, kind: input, shape index: {}]
  %s1 = inlined_call_operand.vmem [shape: f32[16,32], index: 1, kind: input, shape index: {}]
  %s2 = inlined_call_operand.vmem [shape: bf16[64,128], index: 2, kind: input, shape index: {}]
  %s3 = inlined_call_operand.vmem [shape: f32[1,128], index: 3, kind: input, shape index: {}]
  %s4 = inlined_call_operand.vmem [shape: f32[16,64], index: 4, kind: output, shape index: {}]
  %s5 = sld [smem:[#allocation0]]
  $region49: #{lstm_cell.1} parent=0
    _
  %s7 = ssub.s32 1, %s5
  %s8 = scalar_select 0, %s7, %s5
  loop: start=0, step=1, limit=4
  $region2: #{lstm_cell.1} parent=0 // loop_pre_header
    _
  $region3: #{lstm_cell.1} parent=0 // loop_header
    %s10 = sphi 0, %s14
    %p11 = scmp.ge.s32.totalorder %s10, 4
    %s20 = sphi 0, %s22
    %s23 = sphi 0, %s20
    %s24 = sphi 0, %s23
    %s40 = sphi 0, %s24
    %s46 = sphi 0, %s48
    %s49 = sphi 0, %s46
    %s50 = sphi 0, %s49
    %s66 = sphi 0, %s50
    %s70 = sphi 0, %s70
    %s72 = sphi 0, %s70
    %s73 = sphi 0, %s72
    %s87 = sphi 0, %s73
    %s91 = sphi 0, %s91
    %s93 = sphi 0, %s91
    %s94 = sphi 0, %s93
    %s108 = sphi 0, %s94
    %s114 = sphi 0, %s116
    %s117 = sphi 0, %s114
    %s118 = sphi 0, %s117
    %s134 = sphi 0, %s118
  $region4: #{lstm_cell.1} parent=0 // loop_header_branch
    %13 = sbr.rel (%p11) target = $region8
  $region5: #{lstm_cell.1} parent=0 // loop_body
    %s15 = ssub.s32 %s10, 1
    %s16 = ssub.s32 %s10, 2
    %s17 = sadd.s32 %s10, 1
    %s18 = ssub.s32 %s10, %s17
    %p19 = scmp.eq.s32.totalorder %s18, 0
    %s21 = sadd.s32 %s20, 1
    %s22 = scalar_select %p19, %s20, %s21
    %p25 = pneg %p19
    %p26 = scmp.eq.s32.totalorder %s10, 1
    %p27 = por %p25, %p26
    %p28 = scmp.ne.s32.totalorder %s20, %s23
    %p29 = scmp.eq.s32.totalorder %s10, 0
    %p30 = por %p28, %p29
    %p31 = scmp.ne.s32.totalorder %s20, %s23
    %p32 = scmp.eq.s32.totalorder %s15, 1
    %p33 = por %p31, %p32
    %p34 = scmp.ne.s32.totalorder %s23, %s24
    %p35 = scmp.eq.s32.totalorder %s15, 0
    %p36 = por %p34, %p35
    %p37 = scmp.ne.s32.totalorder %s23, %s24
    %p38 = scmp.eq.s32.totalorder %s16, 1
    %p39 = por %p37, %p38
    %p41 = scmp.ne.s32.totalorder %s24, %s40
    %p42 = scmp.eq.s32.totalorder %s16, 0
    %p43 = por %p41, %p42
    %s44 = ssub.s32 %s10, %s17
    %p45 = scmp.eq.s32.totalorder %s44, 0
    %s47 = sadd.s32 %s46, 1
    %s48 = scalar_select %p45, %s46, %s47
    %p51 = pneg %p45
    %p52 = scmp.eq.s32.totalorder %s10, 1
    %p53 = por %p51, %p52
    %p54 = scmp.ne.s32.totalorder %s46, %s49
    %p55 = scmp.eq.s32.totalorder %s10, 0
    %p56 = por %p54, %p55
    %p57 = scmp.ne.s32.totalorder %s46, %s49
    %p58 = scmp.eq.s32.totalorder %s15, 1
    %p59 = por %p57, %p58
    %p60 = scmp.ne.s32.totalorder %s49, %s50
    %p61 = scmp.eq.s32.totalorder %s15, 0
    %p62 = por %p60, %p61
    %p63 = scmp.ne.s32.totalorder %s49, %s50
    %p64 = scmp.eq.s32.totalorder %s16, 1
    %p65 = por %p63, %p64
    %p67 = scmp.ne.s32.totalorder %s50, %s66
    %p68 = scmp.eq.s32.totalorder %s16, 0
    %p69 = por %p67, %p68
    %s71 = sadd.s32 %s70, 1
    %p74 = scmp.eq.s32.totalorder %s10, 1
    %p75 = scmp.ne.s32.totalorder %s70, %s72
    %p76 = scmp.eq.s32.totalorder %s10, 0
    %p77 = por %p75, %p76
    %p78 = scmp.ne.s32.totalorder %s70, %s72
    %p79 = scmp.eq.s32.totalorder %s15, 1
    %p80 = por %p78, %p79
    %p81 = scmp.ne.s32.totalorder %s72, %s73
    %p82 = scmp.eq.s32.totalorder %s15, 0
    %p83 = por %p81, %p82
    %p84 = scmp.ne.s32.totalorder %s72, %s73
    %p85 = scmp.eq.s32.totalorder %s16, 1
    %p86 = por %p84, %p85
    %p88 = scmp.ne.s32.totalorder %s73, %s87
    %p89 = scmp.eq.s32.totalorder %s16, 0
    %p90 = por %p88, %p89
    %s92 = sadd.s32 %s91, 1
    %p95 = scmp.eq.s32.totalorder %s10, 1
    %p96 = scmp.ne.s32.totalorder %s91, %s93
    %p97 = scmp.eq.s32.totalorder %s10, 0
    %p98 = por %p96, %p97
    %p99 = scmp.ne.s32.totalorder %s91, %s93
    %p100 = scmp.eq.s32.totalorder %s15, 1
    %p101 = por %p99, %p100
    %p102 = scmp.ne.s32.totalorder %s93, %s94
    %p103 = scmp.eq.s32.totalorder %s15, 0
    %p104 = por %p102, %p103
    %p105 = scmp.ne.s32.totalorder %s93, %s94
    %p106 = scmp.eq.s32.totalorder %s16, 1
    %p107 = por %p105, %p106
    %p109 = scmp.ne.s32.totalorder %s94, %s108
    %p110 = scmp.eq.s32.totalorder %s16, 0
    %p111 = por %p109, %p110
    %s112 = ssub.s32 %s10, %s17
    %p113 = scmp.eq.s32.totalorder %s112, 0
    %s115 = sadd.s32 %s114, 1
    %s116 = scalar_select %p113, %s114, %s115
    %p119 = pneg %p113
    %p120 = scmp.eq.s32.totalorder %s10, 1
    %p121 = por %p119, %p120
    %p122 = scmp.ne.s32.totalorder %s114, %s117
    %p123 = scmp.eq.s32.totalorder %s10, 0
    %p124 = por %p122, %p123
    %p125 = scmp.ne.s32.totalorder %s114, %s117
    %p126 = scmp.eq.s32.totalorder %s15, 1
    %p127 = por %p125, %p126
    %p128 = scmp.ne.s32.totalorder %s117, %s118
    %p129 = scmp.eq.s32.totalorder %s15, 0
    %p130 = por %p128, %p129
    %p131 = scmp.ne.s32.totalorder %s117, %s118
    %p132 = scmp.eq.s32.totalorder %s16, 1
    %p133 = por %p131, %p132
    %p135 = scmp.ne.s32.totalorder %s118, %s134
    %p136 = scmp.eq.s32.totalorder %s16, 0
    %p137 = por %p135, %p136
    %p138 = scmp.le.s32.totalorder 1, %s10
    %p139 = scmp.lt.s32.totalorder %s10, 3
    %p140 = pnand %p138, %p139
    %p141 = pneg %p140
    // Predicated region
    $region9: #{lstm_cell.1} parent=5 // pred_check
      _
    $region10: #{lstm_cell.1} parent=5 // pred_check_branch
      %143 = sbr.rel (%p140) target = $region12
    $region11: #{lstm_cell.1} parent=5 // pred_region
      %s144 = ssub.s32 %s10, 1
      // Predicated region
      $region13: #{lstm_cell.1} parent=11 // pred_check
        %p145 = pneg %p83
      $region14: #{lstm_cell.1} parent=11 // pred_check_branch
        %147 = sbr.rel (%p145) target = $region16
      $region15: #{lstm_cell.1} parent=11 // pred_region
        _
      $region16: #{lstm_cell.1} parent=11 // pred_fallthru
        _
      // Predicated region
      $region17: #{lstm_cell.1} parent=11 // pred_check
        %p148 = pneg %p104
      $region18: #{lstm_cell.1} parent=11 // pred_check_branch
        %150 = sbr.rel (%p148) target = $region20
      $region19: #{lstm_cell.1} parent=11 // pred_region
        _
      $region20: #{lstm_cell.1} parent=11 // pred_fallthru
        _
    $region12: #{lstm_cell.1} parent=5 // pred_fallthru
      _
    %p151 = scmp.lt.s32.totalorder %s10, 2
    // Predicated region
    $region21: #{lstm_cell.1} parent=5 // pred_check
      %p152 = pneg %p151
    $region22: #{lstm_cell.1} parent=5 // pred_check_branch
      %154 = sbr.rel (%p152) target = $region24
    $region23: #{lstm_cell.1} parent=5 // pred_region
      // Predicated region
      $region25: #{lstm_cell.1} parent=23 // pred_check
        %p155 = pneg %p30
      $region26: #{lstm_cell.1} parent=23 // pred_check_branch
        %157 = sbr.rel (%p155) target = $region28
      $region27: #{lstm_cell.1} parent=23 // pred_region
        %p158 = scmp.lt.s32.totalorder %s10, 1
        %s159 = scalar_select %p158, %s10, 1
        %s160 = smul.addr %s159, 4
        %s161 = scalar_lea.vmem %s0, %s160
      $region28: #{lstm_cell.1} parent=23 // pred_fallthru
        _
      // Predicated region
      $region29: #{lstm_cell.1} parent=23 // pred_check
        %p162 = pneg %p56
      $region30: #{lstm_cell.1} parent=23 // pred_check_branch
        %164 = sbr.rel (%p162) target = $region32
      $region31: #{lstm_cell.1} parent=23 // pred_region
        %p165 = scmp.lt.s32.totalorder %s10, 1
        %s166 = scalar_select %p165, %s10, 1
        %s167 = smul.addr %s166, 8
        %s168 = scalar_lea.vmem %s1, %s167
      $region32: #{lstm_cell.1} parent=23 // pred_fallthru
        _
    $region24: #{lstm_cell.1} parent=5 // pred_fallthru
      _
    %p169 = scmp.le.s32.totalorder 1, %s10
    %p170 = scmp.lt.s32.totalorder %s10, 3
    %p171 = pnand %p169, %p170
    %p172 = pneg %p171
    // Predicated region
    $region33: #{lstm_cell.1} parent=5 // pred_check
      _
    $region34: #{lstm_cell.1} parent=5 // pred_check_branch
      %174 = sbr.rel (%p171) target = $region36
    $region35: #{lstm_cell.1} parent=5 // pred_region
      %s175 = ssub.s32 %s10, 1
      %p176 = scmp.lt.s32.totalorder %s15, 1
      %s177 = scalar_select %p176, %s15, 1
      %s178 = smul.addr %s177, 4
      %s179 = scalar_lea.vmem %s0, %s178
      %p180 = pneg %p36
      %p181 = pneg %p33
      %p182 = scmp.lt.s32.totalorder %s15, 1
      %s183 = scalar_select %p182, %s15, 1
      %s184 = smul.addr %s183, 8
      %s185 = scalar_lea.vmem %s1, %s184
      %p186 = pneg %p62
      %p187 = pneg %p59
      %p188 = pneg %p83
      %p189 = pneg %p80
      %p190 = pneg %p104
      %p191 = pneg %p101
      %p192 = pneg %p130
      %p193 = pneg %p127
      %p194 = scmp.lt.s32.totalorder %s15, 1
      %s195 = scalar_select %p194, %s15, 1
      %s196 = smul.addr %s195, 8
      %s197 = scalar_lea.vmem %s4, %s196
      %p198 = scmp.lt.s32.totalorder %s15, 1
      %s199 = scalar_select %p198, %s15, 1
      %s200 = smul.addr %s199, 4
      %s201 = scalar_lea.vmem %s0, %s200
      %p202 = scmp.lt.s32.totalorder %s15, 1
      %s203 = scalar_select %p202, %s15, 1
      %s204 = smul.addr %s203, 8
      %s205 = scalar_lea.vmem %s1, %s204
      %p206 = scmp.lt.s32.totalorder %s15, 1
      %s207 = scalar_select %p206, %s15, 1
      %s208 = smul.addr %s207, 8
      %s209 = scalar_lea.vmem %s4, %s208
      %v211 = vld [vmem:[%s201] sm:$0xf]
      %v212 = vld [vmem:[%s2] sm:$0xf]
      %v213 = vld [vmem:[%s2 + $0x4] sm:$0xf]
      %v214 = vld [vmem:[%s2 + $0x8] sm:$0xf]
      %v215 = vld [vmem:[%s2 + $0xc] sm:$0xf]
      %v216 = vld [vmem:[%s2 + $0x10] sm:$0xf]
      %v217 = vld [vmem:[%s2 + $0x14] sm:$0xf]
      %v218 = vld [vmem:[%s2 + $0x18] sm:$0xf]
      %v219 = vld [vmem:[%s2 + $0x1c] sm:$0xf]
      %v220 = vld [vmem:[%s3] sm:$0x1]
      %v222 = vlaneseq
      %v223 = vshrl.u32 %v222, 7
      %v224 = vsub.s32 0, %v223
      %v225 = vrot.slane %v220, %v224
      %v235 = vunpack.c.l.b16 %v212
      %v236 = vunpack.c.l.b16 %v213
      %v237 = vunpack.c.l.b16 %v214
      %v238 = vunpack.c.l.b16 %v215
      %v239 = vunpack.c.l.b16 %v216
      %v240 = vunpack.c.l.b16 %v217
      %v241 = vunpack.c.l.b16 %v218
      %v242 = vunpack.c.l.b16 %v219
      %v243 = vpack.c.b16 %v236, %v235
      %v244 = vpack.c.b16 %v238, %v237
      %v245 = vpack.c.b16 %v240, %v239
      %v246 = vpack.c.b16 %v242, %v241
      %vm251 = vcmask 523264
      %v253 = vsel %vm251, %v211, 0
      %255 = vmatprep.subr.bf16.mxu0 0
      %256 = vmatpush1.bf16.msra.mxu0 %v243
      %257 = vmatprep.subr.bf16.mxu0 0
      %258 = vmatpush1.bf16.msra.mxu0 %v244
      %259 = vmatprep.subr.bf16.mxu0 0
      %260 = vmatpush1.bf16.msra.mxu0 %v245
      %261 = vmatprep.subr.bf16.mxu0 0
      %262 = vmatpush1.bf16.msra.mxu0 %v246
      %263 = vmatprep.subr.bf16.mxu0 0
      %264 = vmatpush1.bf16.msra.mxu0 0
      %265 = vmatprep.subr.bf16.mxu0 0
      %266 = vmatpush1.bf16.msra.mxu0 0
      %267 = vmatprep.subr.bf16.mxu0 0
      %268 = vmatpush1.bf16.msra.mxu0 0
      %269 = vmatprep.subr.bf16.mxu0 0
      %270 = vmatpush1.bf16.msra.mxu0 0
      %271 = vmatprep.subr.bf16.mxu0 0
      %272 = vmatpush1.bf16.msra.mxu0 0
      %273 = vmatprep.subr.bf16.mxu0 0
      %274 = vmatpush1.bf16.msra.mxu0 0
      %275 = vmatprep.subr.bf16.mxu0 0
      %276 = vmatpush1.bf16.msra.mxu0 0
      %277 = vmatprep.subr.bf16.mxu0 0
      %278 = vmatpush1.bf16.msra.mxu0 0
      %279 = vmatprep.subr.bf16.mxu0 0
      %280 = vmatpush1.bf16.msra.mxu0 0
      %281 = vmatprep.subr.bf16.mxu0 0
      %282 = vmatpush1.bf16.msra.mxu0 0
      %283 = vmatprep.subr.bf16.mxu0 0
      %284 = vmatpush1.bf16.msra.mxu0 0
      %285 = vmatprep.subr.bf16.mxu0 0
      %286 = vmatpush1.bf16.msra.mxu0 0
      %287 = vmatprep.mubr.bf16.mxu0 0
      %288 = vmatmul.mubr.bf16.gmra.mrb[0].mxu0 %v253
      %v289 = vpop.f32.mrb[0].mxu0
      %v290 = vadd.f32 %v225, %v289
      %v291 = vpop.f32.mrb[0].mxu0
      %v292 = vpop.f32.mrb[0].mxu0
      %v293 = vpop.f32.mrb[0].mxu0
      %294 = vdwg.mxu0
      %v295 = vxor.u32 %v290, 2147483648
      %v296 = vmul.f32 %v295, 1.442695
      %v297 = vpow.pop %v296
      %v298 = vadd.f32 %v297, 1.0
      %v299 = vrcp.pop %v298
      %v300 = vmul.f32 1.0, %v299
      %v301 = vtanh.pop %v290
      %v302 = vld [vmem:[%s205] sm:$0xff]
      %304 = vrot.lane.b32.xlu0 %v300, 96
      %v305 = vpop.permute.xlu0 %304
      %v307 = vmul.f32 %v302, %v305
      %309 = vrot.lane.b32.xlu0 %v301, 32
      %v310 = vpop.permute.xlu0 %309
      %v312 = vmul.f32 %v300, %v310
      %v313 = vadd.f32 %v307, %v312
      %v314 = vtanh.pop %v313
      %316 = vrot.lane.b32.xlu0 %v314, 64
      %v317 = vpop.permute.xlu0 %316
      %v319 = vmul.f32 %v300, %v317
      %321 = vrot.lane.b32.xlu0 %v319, 64
      %v322 = vpop.permute.xlu0 %321
      %325 = vrot.lane.b32.xlu0 %v313, 32
      %v326 = vpop.permute.xlu0 %325
      %vm328 = vcmask 261120
      %v329 = vsel %vm328, %v322, %v326
      %330 = vst.msk [vmem:[%s209] sm:$0xff] %vm251, %v329
      %p331 = scmp.lt.s32.totalorder %s15, 1
      %s332 = scalar_select %p331, %s15, 1
      %s333 = smul.addr %s332, 8
      %s334 = scalar_lea.vmem %s4, %s333
      // Predicated region
      $region37: #{lstm_cell.1} parent=35 // pred_check
        %p335 = pneg %p127
      $region38: #{lstm_cell.1} parent=35 // pred_check_branch
        %337 = sbr.rel (%p335) target = $region40
      $region39: #{lstm_cell.1} parent=35 // pred_region
        _
      $region40: #{lstm_cell.1} parent=35 // pred_fallthru
        _
    $region36: #{lstm_cell.1} parent=5 // pred_fallthru
      _
    %p338 = scmp.le.s32.totalorder 2, %s10
    // Predicated region
    $region41: #{lstm_cell.1} parent=5 // pred_check
      %p339 = pneg %p338
    $region42: #{lstm_cell.1} parent=5 // pred_check_branch
      %341 = sbr.rel (%p339) target = $region44
    $region43: #{lstm_cell.1} parent=5 // pred_region
      %s342 = ssub.s32 %s10, 2
      // Predicated region
      $region45: #{lstm_cell.1} parent=43 // pred_check
        %p343 = pneg %p133
      $region46: #{lstm_cell.1} parent=43 // pred_check_branch
        %345 = sbr.rel (%p343) target = $region48
      $region47: #{lstm_cell.1} parent=43 // pred_region
        %p346 = scmp.lt.s32.totalorder %s16, 1
        %s347 = scalar_select %p346, %s16, 1
        %s348 = smul.addr %s347, 8
        %s349 = scalar_lea.vmem %s4, %s348
      $region48: #{lstm_cell.1} parent=43 // pred_fallthru
        _
    $region44: #{lstm_cell.1} parent=5 // pred_fallthru
      _
  $region6: #{lstm_cell.1} parent=0 // loop_footer
    %s14 = sadd.s32 1, %s10
  $region7: #{lstm_cell.1} parent=0 // loop_footer_branch
    %9 = sbr.rel target = $region3
  $region8: #{lstm_cell.1} parent=0 // loop_exit
    _

</llo_original>
